<compile_context>
chip_gen: v7x
topology: tpu7x:2x2x1
jax: 0.10.0
libtpu: 0.0.40
codegen_flags: <defaults>
</compile_context>

<pallas_src>
import functools

import jax
import jax.numpy as jnp
from jax.experimental import pallas as pl
from jax.experimental.pallas import tpu as pltpu

LANE = 128       # lane width: last-dim padding target
SUBLANE = 8      # f32 sublane width: batch padding target
# Keep resident (padded) params well under scoped VMEM on every generation
# (v7x has only 64 MiB physical / 32 MiB scoped).
_MAX_RESIDENT_PARAM_BYTES = 8 * 1024 * 1024


def _round_up(n, m):
    return ((n + m - 1) // m) * m


def _mlp_fused_kernel(*refs, n_layers):
    """Fused MLP: relu(x @ W1 + b1) -> ... -> x @ Wn + bn.

    refs layout: (x_ref, w1_ref, b1_ref, ..., wn_ref, bn_ref, o_ref)
    All feature dims are pre-padded to multiples of 128; padded columns stay
    exactly zero through every layer, so valid outputs are unaffected.
    """
    x_ref = refs[0]
    o_ref = refs[-1]
    wb = refs[1:-1]
    h = x_ref[...]
    for i in range(n_layers):
        w = wb[2 * i][...]
        b = wb[2 * i + 1][...]
        h = jnp.dot(h, w, preferred_element_type=jnp.float32) + b
        if i != n_layers - 1:
            h = jnp.maximum(h, 0.0)          # ReLU between all but the last layer
    o_ref[...] = h.astype(o_ref.dtype)


def init_mlp_params(key, neurons):
    """Deterministic init mimicking nn.Linear's uniform(+-1/sqrt(fan_in)) ranges."""
    params = []
    for i in range(len(neurons) - 1):
        fan_in, fan_out = neurons[i], neurons[i + 1]
        key, kw, kb = jax.random.split(key, 3)
        bound = 1.0 / jnp.sqrt(fan_in)
        # Store weight as [in, out] (transpose of PyTorch's [out, in]).
        w = jax.random.uniform(kw, (fan_in, fan_out), jnp.float32, -bound, bound)
        b = jax.random.uniform(kb, (fan_out,), jnp.float32, -bound, bound)
        params.append((w, b))
    return params


def pad_params_lane_dense(params, compute_dtype=jnp.float32):
    """One-time zero-padding of every weight/bias so all feature dims are
    multiples of 128 lanes (lane-dense matmuls + unmasked stores).

    compute_dtype=jnp.bfloat16 can be used on v6e/v7x for 2x MXU throughput
    (accumulation stays f32 in-kernel) if ~1e-2 accuracy is acceptable.
    """
    padded = []
    for w, b in params:
        k, n = w.shape
        kp, np_ = _round_up(k, LANE), _round_up(n, LANE)
        wp = jnp.zeros((kp, np_), compute_dtype).at[:k, :n].set(w.astype(compute_dtype))
        bp = jnp.zeros((1, np_), compute_dtype).at[0, :n].set(b.astype(compute_dtype))
        padded.append((wp, bp))
    return padded


def _pick_tm(m_padded):
    """Pick a batch tile: >=2 grid steps when possible (feeds both v7x TCs),
    sublane-aligned, and never larger than the (padded) batch."""
    for tm in (512, 256, 128, 64, 32, 16, 8):
        if m_padded % tm == 0 and m_padded // tm >= 2:
            return tm
    return m_padded


def mlp_forward_fused(padded_params, x, *, out_features):
    """y = MLP(x) via a single fused Pallas kernel.  x: [B, in_features]."""
    n_layers = len(padded_params)
    compute_dtype = padded_params[0][0].dtype

    m, k = x.shape
    kp = padded_params[0][0].shape[0]
    np_last = padded_params[-1][0].shape[1]

    # Pad batch to a sublane multiple and features to the padded input width.
    mp = _round_up(m, SUBLANE)
    xp = jnp.zeros((mp, kp), compute_dtype).at[:m, :k].set(x.astype(compute_dtype))

    param_bytes = sum(w.size * w.dtype.itemsize + b.size * b.dtype.itemsize
                      for w, b in padded_params)
    assert param_bytes <= _MAX_RESIDENT_PARAM_BYTES, (
        "Padded weights too large to keep resident in VMEM; switch to K/N "
        "tiling (see TODO at top of file).")

    tm = _pick_tm(mp)
    grid = (mp // tm,)

    in_specs = [pl.BlockSpec((tm, kp), lambda i: (i, 0))]        # x tile
    flat_params = []
    for w, b in padded_params:
        kw, nw = w.shape
        in_specs.append(pl.BlockSpec((kw, nw), lambda i: (0, 0)))  # full weight
        in_specs.append(pl.BlockSpec((1, nw), lambda i: (0, 0)))   # bias row
        flat_params.extend([w, b])

    flops = 2 * mp * sum(w.shape[0] * w.shape[1] for w, _ in padded_params)
    bytes_accessed = (xp.size * xp.dtype.itemsize + param_bytes
                      + mp * np_last * jnp.dtype(compute_dtype).itemsize)

    y_padded = pl.pallas_call(
        functools.partial(_mlp_fused_kernel, n_layers=n_layers),
        out_shape=jax.ShapeDtypeStruct((mp, np_last), compute_dtype),
        grid_spec=pl.GridSpec(
            grid=grid,
            in_specs=in_specs,
            out_specs=pl.BlockSpec((tm, np_last), lambda i: (i, 0)),
        ),
        compiler_params=pltpu.CompilerParams(
            dimension_semantics=("parallel",)),
        cost_estimate=pl.CostEstimate(
            flops=flops, transcendentals=0, bytes_accessed=bytes_accessed),
    )(xp, *flat_params)

    # Slice away batch/lane padding (all zeros) to recover the logical output.
    return y_padded[:m, :out_features].astype(x.dtype)


def mlp_reference(params, x):
    """Pure-JAX reference for correctness checking (matches MLP.forward)."""
    n_layers = len(params)
    for i, (w, b) in enumerate(params):
        x = x @ w + b
        if i != n_layers - 1:
            x = jnp.maximum(x, 0.0)
    return x


if __name__ == "__main__":
    key = jax.random.PRNGKey(0)
    neurons = (32, 64, 32, 16)   # MLP(neurons): 3 Linear layers, ReLU after first two
    batch = 8

    k_params, k_x = jax.random.split(key)
    params = init_mlp_params(k_params, neurons)
    x = jax.random.normal(k_x, (batch, neurons[0]), jnp.float32)

    # One-time lane-dense padding of parameters (f32 compute keeps the strict
    # correctness tolerance; use jnp.bfloat16 on v6e/v7x for MXU throughput).
    padded_params = pad_params_lane_dense(params, compute_dtype=jnp.float32)

    fwd = jax.jit(functools.partial(mlp_forward_fused, out_features=neurons[-1]))
    out = fwd(padded_params, x)
    jax.block_until_ready(out)

    ref = mlp_reference(params, x)
    assert out.shape == (batch, neurons[-1])
    assert jnp.allclose(out, ref, atol=1e-5, rtol=1e-5), float(jnp.max(jnp.abs(out - ref)))

    print("KERNEL_OK")
</pallas_src>

<mosaic_0001>
module attributes {stable_mosaic.version = 11 : i64} {
  func.func @_mlp_fused_kernel(%arg0: i32, %arg1: memref<8x128xf32, #tpu.memory_space<vmem>>, %arg2: memref<128x128xf32, #tpu.memory_space<vmem>>, %arg3: memref<1x128xf32, #tpu.memory_space<vmem>>, %arg4: memref<128x128xf32, #tpu.memory_space<vmem>>, %arg5: memref<1x128xf32, #tpu.memory_space<vmem>>, %arg6: memref<128x128xf32, #tpu.memory_space<vmem>>, %arg7: memref<1x128xf32, #tpu.memory_space<vmem>>, %arg8: memref<8x128xf32, #tpu.memory_space<vmem>>) attributes {dimension_semantics = [#tpu.dimension_semantics<parallel>], iteration_bounds = array<i64: 1>, scalar_prefetch = 0 : i64, scratch_operands = 0 : i64, tpu.core_type = #tpu.core_type<tc>, window_params = [{transform_indices = @transform_0, window_bounds = array<i64: 8, 128>}, {pipeline_mode = #tpu.pipeline_mode<synchronous>, transform_indices = @transform_1, window_bounds = array<i64: 128, 128>}, {pipeline_mode = #tpu.pipeline_mode<synchronous>, transform_indices = @transform_2, window_bounds = array<i64: 1, 128>}, {pipeline_mode = #tpu.pipeline_mode<synchronous>, transform_indices = @transform_3, window_bounds = array<i64: 128, 128>}, {pipeline_mode = #tpu.pipeline_mode<synchronous>, transform_indices = @transform_4, window_bounds = array<i64: 1, 128>}, {pipeline_mode = #tpu.pipeline_mode<synchronous>, transform_indices = @transform_5, window_bounds = array<i64: 128, 128>}, {pipeline_mode = #tpu.pipeline_mode<synchronous>, transform_indices = @transform_6, window_bounds = array<i64: 1, 128>}, {transform_indices = @transform_7, window_bounds = array<i64: 8, 128>}]} {
    %c0 = arith.constant 0 : index
    %c0_0 = arith.constant 0 : index
    %0 = vector.load %arg1[%c0, %c0_0] : memref<8x128xf32, #tpu.memory_space<vmem>>, vector<8x128xf32>
    %c0_1 = arith.constant 0 : index
    %c0_2 = arith.constant 0 : index
    %1 = vector.load %arg2[%c0_1, %c0_2] : memref<128x128xf32, #tpu.memory_space<vmem>>, vector<128x128xf32>
    %c0_3 = arith.constant 0 : index
    %c0_4 = arith.constant 0 : index
    %2 = vector.load %arg3[%c0_3, %c0_4] : memref<1x128xf32, #tpu.memory_space<vmem>>, vector<1x128xf32>
    %cst = arith.constant dense<0.000000e+00> : vector<8x128xf32>
    %3 = tpu.matmul %0, %1, %cst {dimension_numbers = #tpu.dot_dimension_numbers<[1], [0], [0], [1], [0, 0, 1, 1], [], []>} : vector<8x128xf32>, vector<128x128xf32>, vector<8x128xf32> -> vector<8x128xf32>
    %4 = vector.broadcast %2 : vector<1x128xf32> to vector<8x128xf32>
    %5 = arith.addf %3, %4 : vector<8x128xf32>
    %cst_5 = arith.constant 0.000000e+00 : f32
    %6 = vector.broadcast %cst_5 : f32 to vector<8x128xf32>
    %7 = arith.maximumf %5, %6 : vector<8x128xf32>
    %c0_6 = arith.constant 0 : index
    %c0_7 = arith.constant 0 : index
    %8 = vector.load %arg4[%c0_6, %c0_7] : memref<128x128xf32, #tpu.memory_space<vmem>>, vector<128x128xf32>
    %c0_8 = arith.constant 0 : index
    %c0_9 = arith.constant 0 : index
    %9 = vector.load %arg5[%c0_8, %c0_9] : memref<1x128xf32, #tpu.memory_space<vmem>>, vector<1x128xf32>
    %cst_10 = arith.constant dense<0.000000e+00> : vector<8x128xf32>
    %10 = tpu.matmul %7, %8, %cst_10 {dimension_numbers = #tpu.dot_dimension_numbers<[1], [0], [0], [1], [0, 0, 1, 1], [], []>} : vector<8x128xf32>, vector<128x128xf32>, vector<8x128xf32> -> vector<8x128xf32>
    %11 = vector.broadcast %9 : vector<1x128xf32> to vector<8x128xf32>
    %12 = arith.addf %10, %11 : vector<8x128xf32>
    %cst_11 = arith.constant 0.000000e+00 : f32
    %13 = vector.broadcast %cst_11 : f32 to vector<8x128xf32>
    %14 = arith.maximumf %12, %13 : vector<8x128xf32>
    %c0_12 = arith.constant 0 : index
    %c0_13 = arith.constant 0 : index
    %15 = vector.load %arg6[%c0_12, %c0_13] : memref<128x128xf32, #tpu.memory_space<vmem>>, vector<128x128xf32>
    %c0_14 = arith.constant 0 : index
    %c0_15 = arith.constant 0 : index
    %16 = vector.load %arg7[%c0_14, %c0_15] : memref<1x128xf32, #tpu.memory_space<vmem>>, vector<1x128xf32>
    %cst_16 = arith.constant dense<0.000000e+00> : vector<8x128xf32>
    %17 = tpu.matmul %14, %15, %cst_16 {dimension_numbers = #tpu.dot_dimension_numbers<[1], [0], [0], [1], [0, 0, 1, 1], [], []>} : vector<8x128xf32>, vector<128x128xf32>, vector<8x128xf32> -> vector<8x128xf32>
    %18 = vector.broadcast %16 : vector<1x128xf32> to vector<8x128xf32>
    %19 = arith.addf %17, %18 : vector<8x128xf32>
    %c0_17 = arith.constant 0 : index
    %c0_18 = arith.constant 0 : index
    %20 = vector.load %arg8[%c0_17, %c0_18] : memref<8x128xf32, #tpu.memory_space<vmem>>, vector<8x128xf32>
    tpu.vector_store %arg8[%c0_17, %c0_18], %19 {strides = array<i32>} : memref<8x128xf32, #tpu.memory_space<vmem>>, vector<8x128xf32>,
    return
  }
  func.func @transform_0(%arg0: i32) -> (i32, i32) {
    %c0_i32 = arith.constant 0 : i32
    %c0_i32_0 = arith.constant 0 : i32
    return %arg0, %c0_i32 : i32, i32
  }
  func.func @transform_1(%arg0: i32) -> (i32, i32) {
    %c0_i32 = arith.constant 0 : i32
    %c0_i32_0 = arith.constant 0 : i32
    %c0_i32_1 = arith.constant 0 : i32
    return %c0_i32, %c0_i32_0 : i32, i32
  }
  func.func @transform_2(%arg0: i32) -> (i32, i32) {
    %c0_i32 = arith.constant 0 : i32
    %c0_i32_0 = arith.constant 0 : i32
    %c0_i32_1 = arith.constant 0 : i32
    return %c0_i32, %c0_i32_0 : i32, i32
  }
  func.func @transform_3(%arg0: i32) -> (i32, i32) {
    %c0_i32 = arith.constant 0 : i32
    %c0_i32_0 = arith.constant 0 : i32
    %c0_i32_1 = arith.constant 0 : i32
    return %c0_i32, %c0_i32_0 : i32, i32
  }
  func.func @transform_4(%arg0: i32) -> (i32, i32) {
    %c0_i32 = arith.constant 0 : i32
    %c0_i32_0 = arith.constant 0 : i32
    %c0_i32_1 = arith.constant 0 : i32
    return %c0_i32, %c0_i32_0 : i32, i32
  }
  func.func @transform_5(%arg0: i32) -> (i32, i32) {
    %c0_i32 = arith.constant 0 : i32
    %c0_i32_0 = arith.constant 0 : i32
    %c0_i32_1 = arith.constant 0 : i32
    return %c0_i32, %c0_i32_0 : i32, i32
  }
  func.func @transform_6(%arg0: i32) -> (i32, i32) {
    %c0_i32 = arith.constant 0 : i32
    %c0_i32_0 = arith.constant 0 : i32
    %c0_i32_1 = arith.constant 0 : i32
    return %c0_i32, %c0_i32_0 : i32, i32
  }
  func.func @transform_7(%arg0: i32) -> (i32, i32) {
    %c0_i32 = arith.constant 0 : i32
    %c0_i32_0 = arith.constant 0 : i32
    return %arg0, %c0_i32 : i32, i32
  }
}

</mosaic_0001>

<llo_original>
// kernel: mlp_forward_fused.1
$region0: #{mlp_forward_fused.1}
  #allocation0 [shape = 'u32[]', space=smem, size = 0x4, offset = 0x4, fixed_abs, tag = 'smem constant byte address 0x4 - core index']
  #allocation1 [shape = 'u32[144,128]{1,0:T(1,128)}', space=vmem, size = 0x12000, scoped, tag = 'internal scratch']
  %s0 = inlined_call_operand.vmem [shape: f32[8,128], index: 0, kind: input, shape index: {}]
  %s1 = inlined_call_operand.hbm [shape: f32[128,128], index: 1, kind: input, shape index: {}]
  %s2 = inlined_call_operand.vmem [shape: f32[1,128], index: 2, kind: input, shape index: {}]
  %s3 = inlined_call_operand.hbm [shape: f32[128,128], index: 3, kind: input, shape index: {}]
  %s4 = inlined_call_operand.vmem [shape: f32[1,128], index: 4, kind: input, shape index: {}]
  %s5 = inlined_call_operand.hbm [shape: f32[128,128], index: 5, kind: input, shape index: {}]
  %s6 = inlined_call_operand.vmem [shape: f32[1,128], index: 6, kind: input, shape index: {}]
  %s7 = inlined_call_operand.hbm [shape: f32[8,128], index: 7, kind: output, shape index: {}]
  %s8 = sld [smem:[#allocation0]]
  $region50: #{mlp_forward_fused.1} parent=0
    _
  %s10 = ssub.s32 1, %s8
  %s11 = scalar_select 0, %s10, %s8
  $region1: #{mlp_forward_fused.1} parent=0
    #allocation2 [shape = 'u8[65536]{0}', space=vmem, size = 0x10000, scoped, tag = 'input window, operand 1, single buffered']
    #allocation3 [shape = 's32[1]{0}', space=sflag, size = 0x4, scoped, tag = 'scoped memory for mlp_forward_fused.1']
    #allocation4 [shape = 's32[1]{0}', space=sflag, size = 0x4, scoped, tag = 'scoped memory for mlp_forward_fused.1']
    #allocation5 [shape = 'u8[65536]{0}', space=vmem, size = 0x10000, scoped, tag = 'input window, operand 3, single buffered']
    #allocation6 [shape = 's32[1]{0}', space=sflag, size = 0x4, scoped, tag = 'scoped memory for mlp_forward_fused.1']
    #allocation7 [shape = 'u8[65536]{0}', space=vmem, size = 0x10000, scoped, tag = 'input window, operand 5, single buffered']
    #allocation8 [shape = 'u8[4096]{0}', space=vmem, size = 0x1000, scoped, tag = 'output window, operand 0, single buffered']
    %12 = vsyncpa [#allocation3], 0
    %13 = vsyncpa [#allocation6], 0
    %14 = vsyncpa [#allocation4], 0
    // Predicated region
    $region2: #{mlp_forward_fused.1} parent=1 // pred_check
      _
    $region3: #{mlp_forward_fused.1} parent=1 // pred_check_branch
      %16 = sbr.rel (0) target = $region5
    $region4: #{mlp_forward_fused.1} parent=1 // pred_region
      _
    $region5: #{mlp_forward_fused.1} parent=1 // pred_fallthru
      _
    // Predicated region
    $region6: #{mlp_forward_fused.1} parent=1 // pred_check
      _
    $region7: #{mlp_forward_fused.1} parent=1 // pred_check_branch
      %18 = sbr.rel (0) target = $region9
    $region8: #{mlp_forward_fused.1} parent=1 // pred_region
      %s20 = ssub.s32 2048, 2048
      %21 = vsyncadd [#allocation3], %s20
      %s22 = sshll.u32 [#allocation2], 4
      %s23 = int_to_ptr.vmem [resolvable:$true] %s22
      %28 = dma.hbm_to_vmem [thread:$0]  %s1, 2048, %s23, [#allocation3], 128, 128, 8
    $region9: #{mlp_forward_fused.1} parent=1 // pred_fallthru
      _
    // Predicated region
    $region10: #{mlp_forward_fused.1} parent=1 // pred_check
      _
    $region11: #{mlp_forward_fused.1} parent=1 // pred_check_branch
      %30 = sbr.rel (0) target = $region13
    $region12: #{mlp_forward_fused.1} parent=1 // pred_region
      _
    $region13: #{mlp_forward_fused.1} parent=1 // pred_fallthru
      _
    // Predicated region
    $region14: #{mlp_forward_fused.1} parent=1 // pred_check
      _
    $region15: #{mlp_forward_fused.1} parent=1 // pred_check_branch
      %32 = sbr.rel (0) target = $region17
    $region16: #{mlp_forward_fused.1} parent=1 // pred_region
      %s34 = ssub.s32 2048, 2048
      %35 = vsyncadd [#allocation6], %s34
      %s36 = sshll.u32 [#allocation5], 4
      %s37 = int_to_ptr.vmem [resolvable:$true] %s36
      %42 = dma.hbm_to_vmem [thread:$0]  %s3, 2048, %s37, [#allocation6], 128, 128, 8
    $region17: #{mlp_forward_fused.1} parent=1 // pred_fallthru
      _
    // Predicated region
    $region18: #{mlp_forward_fused.1} parent=1 // pred_check
      _
    $region19: #{mlp_forward_fused.1} parent=1 // pred_check_branch
      %44 = sbr.rel (0) target = $region21
    $region20: #{mlp_forward_fused.1} parent=1 // pred_region
      _
    $region21: #{mlp_forward_fused.1} parent=1 // pred_fallthru
      _
    // Predicated region
    $region22: #{mlp_forward_fused.1} parent=1 // pred_check
      _
    $region23: #{mlp_forward_fused.1} parent=1 // pred_check_branch
      %46 = sbr.rel (0) target = $region25
    $region24: #{mlp_forward_fused.1} parent=1 // pred_region
      %s48 = ssub.s32 2048, 2048
      %49 = vsyncadd [#allocation6], %s48
      %s50 = sshll.u32 [#allocation7], 4
      %s51 = int_to_ptr.vmem [resolvable:$true] %s50
      %56 = dma.hbm_to_vmem [thread:$0]  %s5, 2048, %s51, [#allocation6], 128, 128, 8
    $region25: #{mlp_forward_fused.1} parent=1 // pred_fallthru
      _
    // Predicated region
    $region26: #{mlp_forward_fused.1} parent=1 // pred_check
      _
    $region27: #{mlp_forward_fused.1} parent=1 // pred_check_branch
      %58 = sbr.rel (0) target = $region29
    $region28: #{mlp_forward_fused.1} parent=1 // pred_region
      _
    $region29: #{mlp_forward_fused.1} parent=1 // pred_fallthru
      _
    // Predicated region
    $region30: #{mlp_forward_fused.1} parent=1 // pred_check
      _
    $region31: #{mlp_forward_fused.1} parent=1 // pred_check_branch
      %60 = sbr.rel (0) target = $region33
    $region32: #{mlp_forward_fused.1} parent=1 // pred_region
      %61 = dma.done [#allocation3], 2048
    $region33: #{mlp_forward_fused.1} parent=1 // pred_fallthru
      _
    // Predicated region
    $region34: #{mlp_forward_fused.1} parent=1 // pred_check
      _
    $region35: #{mlp_forward_fused.1} parent=1 // pred_check_branch
      %63 = sbr.rel (0) target = $region37
    $region36: #{mlp_forward_fused.1} parent=1 // pred_region
      %64 = dma.done [#allocation6], 2048
    $region37: #{mlp_forward_fused.1} parent=1 // pred_fallthru
      _
    // Predicated region
    $region38: #{mlp_forward_fused.1} parent=1 // pred_check
      _
    $region39: #{mlp_forward_fused.1} parent=1 // pred_check_branch
      %66 = sbr.rel (0) target = $region41
    $region40: #{mlp_forward_fused.1} parent=1 // pred_region
      %67 = dma.done [#allocation6], 2048
    $region41: #{mlp_forward_fused.1} parent=1 // pred_fallthru
      _
    %v68 = vld [vmem:[%s0] sm:$0xff]
    %v69 = vld [vmem:[#allocation2] sm:$0xff]
    %v70 = vld [vmem:[#allocation2 + $0x8] sm:$0xff]
    %v71 = vld [vmem:[#allocation2 + $0x10] sm:$0xff]
    %v72 = vld [vmem:[#allocation2 + $0x18] sm:$0xff]
    %v73 = vld [vmem:[#allocation2 + $0x20] sm:$0xff]
    %v74 = vld [vmem:[#allocation2 + $0x28] sm:$0xff]
    %v75 = vld [vmem:[#allocation2 + $0x30] sm:$0xff]
    %v76 = vld [vmem:[#allocation2 + $0x38] sm:$0xff]
    %v77 = vld [vmem:[#allocation2 + $0x40] sm:$0xff]
    %v78 = vld [vmem:[#allocation2 + $0x48] sm:$0xff]
    %v79 = vld [vmem:[#allocation2 + $0x50] sm:$0xff]
    %v80 = vld [vmem:[#allocation2 + $0x58] sm:$0xff]
    %v81 = vld [vmem:[#allocation2 + $0x60] sm:$0xff]
    %v82 = vld [vmem:[#allocation2 + $0x68] sm:$0xff]
    %v83 = vld [vmem:[#allocation2 + $0x70] sm:$0xff]
    %v84 = vld [vmem:[#allocation2 + $0x78] sm:$0xff]
    %v85 = vld [vmem:[%s2] sm:$0x1]
    %v87 = vlaneseq
    %v88 = vshrl.u32 %v87, 7
    %v89 = vsub.s32 0, %v88
    %v90 = vrot.slane %v85, %v89
    %92 = vmatprep.subr.mxu0 0.0
    %93 = vmatpush1.msra.mxu0 %v69
    %94 = vmatprep.subr.mxu0 0.0
    %95 = vmatpush1.msra.mxu0 %v70
    %96 = vmatprep.subr.mxu0 0.0
    %97 = vmatpush1.msra.mxu0 %v71
    %98 = vmatprep.subr.mxu0 0.0
    %99 = vmatpush1.msra.mxu0 %v72
    %100 = vmatprep.subr.mxu0 0.0
    %101 = vmatpush1.msra.mxu0 %v73
    %102 = vmatprep.subr.mxu0 0.0
    %103 = vmatpush1.msra.mxu0 %v74
    %104 = vmatprep.subr.mxu0 0.0
    %105 = vmatpush1.msra.mxu0 %v75
    %106 = vmatprep.subr.mxu0 0.0
    %107 = vmatpush1.msra.mxu0 %v76
    %108 = vmatprep.subr.mxu0 0.0
    %109 = vmatpush1.msra.mxu0 %v77
    %110 = vmatprep.subr.mxu0 0.0
    %111 = vmatpush1.msra.mxu0 %v78
    %112 = vmatprep.subr.mxu0 0.0
    %113 = vmatpush1.msra.mxu0 %v79
    %114 = vmatprep.subr.mxu0 0.0
    %115 = vmatpush1.msra.mxu0 %v80
    %116 = vmatprep.subr.mxu0 0.0
    %117 = vmatpush1.msra.mxu0 %v81
    %118 = vmatprep.subr.mxu0 0.0
    %119 = vmatpush1.msra.mxu0 %v82
    %120 = vmatprep.subr.mxu0 0.0
    %121 = vmatpush1.msra.mxu0 %v83
    %122 = vmatprep.subr.mxu0 0.0
    %123 = vmatpush1.msra.mxu0 %v84
    %124 = vmatprep.subr.mxu0 0.0
    %125 = vmatpush1.msra.mxu0 0.0
    %126 = vmatprep.subr.mxu0 0.0
    %127 = vmatpush1.msra.mxu0 0.0
    %128 = vmatprep.subr.mxu0 0.0
    %129 = vmatpush1.msra.mxu0 0.0
    %130 = vmatprep.subr.mxu0 0.0
    %131 = vmatpush1.msra.mxu0 0.0
    %132 = vmatprep.subr.mxu0 0.0
    %133 = vmatpush1.msra.mxu0 0.0
    %134 = vmatprep.subr.mxu0 0.0
    %135 = vmatpush1.msra.mxu0 0.0
    %136 = vmatprep.subr.mxu0 0.0
    %137 = vmatpush1.msra.mxu0 0.0
    %138 = vmatprep.subr.mxu0 0.0
    %139 = vmatpush1.msra.mxu0 0.0
    %140 = vmatprep.subr.mxu0 0.0
    %141 = vmatpush1.msra.mxu0 0.0
    %142 = vmatprep.subr.mxu0 0.0
    %143 = vmatpush1.msra.mxu0 0.0
    %144 = vmatprep.subr.mxu0 0.0
    %145 = vmatpush1.msra.mxu0 0.0
    %146 = vmatprep.subr.mxu0 0.0
    %147 = vmatpush1.msra.mxu0 0.0
    %148 = vmatprep.subr.mxu0 0.0
    %149 = vmatpush1.msra.mxu0 0.0
    %150 = vmatprep.subr.mxu0 0.0
    %151 = vmatpush1.msra.mxu0 0.0
    %152 = vmatprep.subr.mxu0 0.0
    %153 = vmatpush1.msra.mxu0 0.0
    %154 = vmatprep.subr.mxu0 0.0
    %155 = vmatpush1.msra.mxu0 0.0
    %156 = vmatprep.mubr.f32.mxu0 0.0
    %157 = vmatmul.mubr.f32.gmra.mrb[0].mxu0 %v68
    %v158 = vpop.f32.mrb[0].mxu0
    %v159 = vadd.f32 %v90, %v158
    %v160 = vpop.f32.mrb[0].mxu0
    %161 = vdwg.mxu0
    %v162 = vmax.f32 %v159, 0.0
    %v163 = vld [vmem:[#allocation5] sm:$0xff]
    %v164 = vld [vmem:[#allocation5 + $0x8] sm:$0xff]
    %v165 = vld [vmem:[#allocation5 + $0x10] sm:$0xff]
    %v166 = vld [vmem:[#allocation5 + $0x18] sm:$0xff]
    %v167 = vld [vmem:[#allocation5 + $0x20] sm:$0xff]
    %v168 = vld [vmem:[#allocation5 + $0x28] sm:$0xff]
    %v169 = vld [vmem:[#allocation5 + $0x30] sm:$0xff]
    %v170 = vld [vmem:[#allocation5 + $0x38] sm:$0xff]
    %v171 = vld [vmem:[#allocation5 + $0x40] sm:$0xff]
    %v172 = vld [vmem:[#allocation5 + $0x48] sm:$0xff]
    %v173 = vld [vmem:[#allocation5 + $0x50] sm:$0xff]
    %v174 = vld [vmem:[#allocation5 + $0x58] sm:$0xff]
    %v175 = vld [vmem:[#allocation5 + $0x60] sm:$0xff]
    %v176 = vld [vmem:[#allocation5 + $0x68] sm:$0xff]
    %v177 = vld [vmem:[#allocation5 + $0x70] sm:$0xff]
    %v178 = vld [vmem:[#allocation5 + $0x78] sm:$0xff]
    %v179 = vld [vmem:[%s4] sm:$0x1]
    %v181 = vlaneseq
    %v182 = vshrl.u32 %v181, 7
    %v183 = vsub.s32 0, %v182
    %v184 = vrot.slane %v179, %v183
    %186 = vmatprep.subr.mxu0 0.0
    %187 = vmatpush1.msra.mxu0 %v163
    %188 = vmatprep.subr.mxu0 0.0
    %189 = vmatpush1.msra.mxu0 %v164
    %190 = vmatprep.subr.mxu0 0.0
    %191 = vmatpush1.msra.mxu0 %v165
    %192 = vmatprep.subr.mxu0 0.0
    %193 = vmatpush1.msra.mxu0 %v166
    %194 = vmatprep.subr.mxu0 0.0
    %195 = vmatpush1.msra.mxu0 %v167
    %196 = vmatprep.subr.mxu0 0.0
    %197 = vmatpush1.msra.mxu0 %v168
    %198 = vmatprep.subr.mxu0 0.0
    %199 = vmatpush1.msra.mxu0 %v169
    %200 = vmatprep.subr.mxu0 0.0
    %201 = vmatpush1.msra.mxu0 %v170
    %202 = vmatprep.subr.mxu0 0.0
    %203 = vmatpush1.msra.mxu0 %v171
    %204 = vmatprep.subr.mxu0 0.0
    %205 = vmatpush1.msra.mxu0 %v172
    %206 = vmatprep.subr.mxu0 0.0
    %207 = vmatpush1.msra.mxu0 %v173
    %208 = vmatprep.subr.mxu0 0.0
    %209 = vmatpush1.msra.mxu0 %v174
    %210 = vmatprep.subr.mxu0 0.0
    %211 = vmatpush1.msra.mxu0 %v175
    %212 = vmatprep.subr.mxu0 0.0
    %213 = vmatpush1.msra.mxu0 %v176
    %214 = vmatprep.subr.mxu0 0.0
    %215 = vmatpush1.msra.mxu0 %v177
    %216 = vmatprep.subr.mxu0 0.0
    %217 = vmatpush1.msra.mxu0 %v178
    %218 = vmatprep.subr.mxu0 0.0
    %219 = vmatpush1.msra.mxu0 0.0
    %220 = vmatprep.subr.mxu0 0.0
    %221 = vmatpush1.msra.mxu0 0.0
    %222 = vmatprep.subr.mxu0 0.0
    %223 = vmatpush1.msra.mxu0 0.0
    %224 = vmatprep.subr.mxu0 0.0
    %225 = vmatpush1.msra.mxu0 0.0
    %226 = vmatprep.subr.mxu0 0.0
    %227 = vmatpush1.msra.mxu0 0.0
    %228 = vmatprep.subr.mxu0 0.0
    %229 = vmatpush1.msra.mxu0 0.0
    %230 = vmatprep.subr.mxu0 0.0
    %231 = vmatpush1.msra.mxu0 0.0
    %232 = vmatprep.subr.mxu0 0.0
    %233 = vmatpush1.msra.mxu0 0.0
    %234 = vmatprep.subr.mxu0 0.0
    %235 = vmatpush1.msra.mxu0 0.0
    %236 = vmatprep.subr.mxu0 0.0
    %237 = vmatpush1.msra.mxu0 0.0
    %238 = vmatprep.subr.mxu0 0.0
    %239 = vmatpush1.msra.mxu0 0.0
    %240 = vmatprep.subr.mxu0 0.0
    %241 = vmatpush1.msra.mxu0 0.0
    %242 = vmatprep.subr.mxu0 0.0
    %243 = vmatpush1.msra.mxu0 0.0
    %244 = vmatprep.subr.mxu0 0.0
    %245 = vmatpush1.msra.mxu0 0.0
    %246 = vmatprep.subr.mxu0 0.0
    %247 = vmatpush1.msra.mxu0 0.0
    %248 = vmatprep.subr.mxu0 0.0
    %249 = vmatpush1.msra.mxu0 0.0
    %250 = vmatprep.mubr.f32.mxu0 0.0
    %251 = vmatmul.mubr.f32.gmra.mrb[0].mxu0 %v162
    %v252 = vpop.f32.mrb[0].mxu0
    %v253 = vadd.f32 %v184, %v252
    %v254 = vpop.f32.mrb[0].mxu0
    %255 = vdwg.mxu0
    %v256 = vmax.f32 %v253, 0.0
    %v257 = vld [vmem:[#allocation7] sm:$0xff]
    %v258 = vld [vmem:[#allocation7 + $0x8] sm:$0xff]
    %v259 = vld [vmem:[#allocation7 + $0x10] sm:$0xff]
    %v260 = vld [vmem:[#allocation7 + $0x18] sm:$0xff]
    %v261 = vld [vmem:[#allocation7 + $0x20] sm:$0xff]
    %v262 = vld [vmem:[#allocation7 + $0x28] sm:$0xff]
    %v263 = vld [vmem:[#allocation7 + $0x30] sm:$0xff]
    %v264 = vld [vmem:[#allocation7 + $0x38] sm:$0xff]
    %v265 = vld [vmem:[#allocation7 + $0x40] sm:$0xff]
    %v266 = vld [vmem:[#allocation7 + $0x48] sm:$0xff]
    %v267 = vld [vmem:[#allocation7 + $0x50] sm:$0xff]
    %v268 = vld [vmem:[#allocation7 + $0x58] sm:$0xff]
    %v269 = vld [vmem:[#allocation7 + $0x60] sm:$0xff]
    %v270 = vld [vmem:[#allocation7 + $0x68] sm:$0xff]
    %v271 = vld [vmem:[#allocation7 + $0x70] sm:$0xff]
    %v272 = vld [vmem:[#allocation7 + $0x78] sm:$0xff]
    %v273 = vld [vmem:[%s6] sm:$0x1]
    %v275 = vlaneseq
    %v276 = vshrl.u32 %v275, 7
    %v277 = vsub.s32 0, %v276
    %v278 = vrot.slane %v273, %v277
    %280 = vmatprep.subr.mxu0 0.0
    %281 = vmatpush1.msra.mxu0 %v257
    %282 = vmatprep.subr.mxu0 0.0
    %283 = vmatpush1.msra.mxu0 %v258
    %284 = vmatprep.subr.mxu0 0.0
    %285 = vmatpush1.msra.mxu0 %v259
    %286 = vmatprep.subr.mxu0 0.0
    %287 = vmatpush1.msra.mxu0 %v260
    %288 = vmatprep.subr.mxu0 0.0
    %289 = vmatpush1.msra.mxu0 %v261
    %290 = vmatprep.subr.mxu0 0.0
    %291 = vmatpush1.msra.mxu0 %v262
    %292 = vmatprep.subr.mxu0 0.0
    %293 = vmatpush1.msra.mxu0 %v263
    %294 = vmatprep.subr.mxu0 0.0
    %295 = vmatpush1.msra.mxu0 %v264
    %296 = vmatprep.subr.mxu0 0.0
    %297 = vmatpush1.msra.mxu0 %v265
    %298 = vmatprep.subr.mxu0 0.0
    %299 = vmatpush1.msra.mxu0 %v266
    %300 = vmatprep.subr.mxu0 0.0
    %301 = vmatpush1.msra.mxu0 %v267
    %302 = vmatprep.subr.mxu0 0.0
    %303 = vmatpush1.msra.mxu0 %v268
    %304 = vmatprep.subr.mxu0 0.0
    %305 = vmatpush1.msra.mxu0 %v269
    %306 = vmatprep.subr.mxu0 0.0
    %307 = vmatpush1.msra.mxu0 %v270
    %308 = vmatprep.subr.mxu0 0.0
    %309 = vmatpush1.msra.mxu0 %v271
    %310 = vmatprep.subr.mxu0 0.0
    %311 = vmatpush1.msra.mxu0 %v272
    %312 = vmatprep.subr.mxu0 0.0
    %313 = vmatpush1.msra.mxu0 0.0
    %314 = vmatprep.subr.mxu0 0.0
    %315 = vmatpush1.msra.mxu0 0.0
    %316 = vmatprep.subr.mxu0 0.0
    %317 = vmatpush1.msra.mxu0 0.0
    %318 = vmatprep.subr.mxu0 0.0
    %319 = vmatpush1.msra.mxu0 0.0
    %320 = vmatprep.subr.mxu0 0.0
    %321 = vmatpush1.msra.mxu0 0.0
    %322 = vmatprep.subr.mxu0 0.0
    %323 = vmatpush1.msra.mxu0 0.0
    %324 = vmatprep.subr.mxu0 0.0
    %325 = vmatpush1.msra.mxu0 0.0
    %326 = vmatprep.subr.mxu0 0.0
    %327 = vmatpush1.msra.mxu0 0.0
    %328 = vmatprep.subr.mxu0 0.0
    %329 = vmatpush1.msra.mxu0 0.0
    %330 = vmatprep.subr.mxu0 0.0
    %331 = vmatpush1.msra.mxu0 0.0
    %332 = vmatprep.subr.mxu0 0.0
    %333 = vmatpush1.msra.mxu0 0.0
    %334 = vmatprep.subr.mxu0 0.0
    %335 = vmatpush1.msra.mxu0 0.0
    %336 = vmatprep.subr.mxu0 0.0
    %337 = vmatpush1.msra.mxu0 0.0
    %338 = vmatprep.subr.mxu0 0.0
    %339 = vmatpush1.msra.mxu0 0.0
    %340 = vmatprep.subr.mxu0 0.0
    %341 = vmatpush1.msra.mxu0 0.0
    %342 = vmatprep.subr.mxu0 0.0
    %343 = vmatpush1.msra.mxu0 0.0
    %344 = vmatprep.mubr.f32.mxu0 0.0
    %345 = vmatmul.mubr.f32.gmra.mrb[0].mxu0 %v256
    %v346 = vpop.f32.mrb[0].mxu0
    %v347 = vadd.f32 %v278, %v346
    %v348 = vpop.f32.mrb[0].mxu0
    %349 = vdwg.mxu0
    %350 = vst [vmem:[#allocation8] sm:$0xff] %v347
    // Predicated region
    $region42: #{mlp_forward_fused.1} parent=1 // pred_check
      _
    $region43: #{mlp_forward_fused.1} parent=1 // pred_check_branch
      %352 = sbr.rel (0) target = $region45
    $region44: #{mlp_forward_fused.1} parent=1 // pred_region
      %s354 = ssub.s32 128, 128
      %355 = vsyncadd [#allocation4], %s354
      %s357 = sshll.u32 [#allocation8], 4
      %s358 = int_to_ptr.vmem [resolvable:$true] %s357
      %360 = dma.vmem_to_hbm [thread:$0]  %s358, 128, %s7, [#allocation4]
    $region45: #{mlp_forward_fused.1} parent=1 // pred_fallthru
      _
    // Predicated region
    $region46: #{mlp_forward_fused.1} parent=1 // pred_check
      _
    $region47: #{mlp_forward_fused.1} parent=1 // pred_check_branch
      %362 = sbr.rel (0) target = $region49
    $region48: #{mlp_forward_fused.1} parent=1 // pred_region
      %363 = dma.done [#allocation4], 128
    $region49: #{mlp_forward_fused.1} parent=1 // pred_fallthru
      _
    %364 = vsyncpa [#allocation3], 1
    %365 = vsyncpa [#allocation6], 1
    %366 = vsyncpa [#allocation4], 1

</llo_original>
